<compile_context>
chip_gen: v5e
topology: v5e:2x2
jax: 0.10.0
libtpu: 0.0.40
codegen_flags: <defaults>
</compile_context>

<pallas_src>
import jax
import jax.numpy as jnp
from jax.experimental import pallas as pl
from jax.experimental.pallas import tpu as pltpu


def _model_h_kernel(x_ref, y_ref, m_ref, o_ref):
    # Pure VPU elementwise work; HBM-bandwidth bound.
    o_ref[...] = (x_ref[...] - y_ref[...]) * m_ref[...]


def _vmem_capacity_bytes():
    # Generation-aware VMEM budget; fall back to the smallest (v7x: 64 MiB).
    try:
        return int(pltpu.get_tpu_info().vmem_capacity_bytes)
    except Exception:
        return 64 * 1024 * 1024


def _choose_fold(total):
    """Metadata-only 2D fold (rows, cols) of a contiguous buffer.

    Prefers rows % 8 == 0 (full sublane occupancy of every vreg); grows rows
    in powers of two on very large inputs so columns stay tileable."""
    if total % 8 == 0:
        rows, cols = 8, total // 8
        while rows < 512 and cols > 4096 and cols % 2 == 0:
            rows *= 2
            cols //= 2
        return rows, cols
    return 1, total


def _choose_block_cols(cols, max_block_cols):
    """Largest 128-multiple <= max_block_cols whose remainder tile (if any)
    is also 128-aligned, so no interior/edge tile is ragged in the lanes."""
    if cols <= max_block_cols:
        return cols
    bc = max(128, (max_block_cols // 128) * 128)
    cand = bc
    while cand >= 128:
        rem = cols % cand
        if rem == 0 or rem % 128 == 0:
            return cand
        cand -= 128
    return bc


def model_h_forward(x, y, mask):
    """Pallas equivalent of Model_H.forward: dyout = (x - y) * mask."""
    assert x.shape == y.shape == mask.shape, "x, y, mask must have equal shapes"
    orig_shape = x.shape
    out_dtype = jnp.result_type(x.dtype, y.dtype, mask.dtype)

    # Pre-cast (no-op when dtypes already match) so the kernel body is a pure
    # f32/bf16 VPU stream (no in-kernel bool->float converts).
    x2 = x.astype(out_dtype).reshape(-1)
    y2 = y.astype(out_dtype).reshape(-1)
    m2 = mask.astype(out_dtype).reshape(-1)
    total = int(x2.size)

    rows, cols = _choose_fold(total)
    x2 = x2.reshape(rows, cols)
    y2 = y2.reshape(rows, cols)
    m2 = m2.reshape(rows, cols)

    itemsize = jnp.dtype(out_dtype).itemsize
    vmem_cap = _vmem_capacity_bytes()
    # Double-buffered working set budget (4 arrays x 2 buffers x tile bytes):
    # <= half of physical VMEM -> fits v7x's 64 MiB and leaves headroom on
    # v5e/v6e's 128 MiB.
    footprint_budget = min(vmem_cap // 2, 64 * 1024 * 1024)

    full_footprint = 4 * 2 * rows * cols * itemsize
    if full_footprint <= footprint_budget:
        # Small problem (the real Model_H size): one full lane-dense block,
        # single grid step, unmasked stores.
        block_rows, block_cols = rows, cols
    else:
        # Large problem: big (8,128)-aligned tiles, no ragged lane tiles.
        tile_budget = footprint_budget // 8  # bytes per single tile
        block_rows = rows if rows <= 512 else 512 - (512 % 8)
        max_block_cols = max(128, tile_budget // (block_rows * itemsize))
        block_cols = _choose_block_cols(cols, max_block_cols)

    grid = (pl.cdiv(rows, block_rows), pl.cdiv(cols, block_cols))
    spec = pl.BlockSpec((block_rows, block_cols), lambda i, j: (i, j))

    tile_footprint = 4 * 2 * block_rows * block_cols * itemsize
    cp_kwargs = dict(dimension_semantics=("parallel", "parallel"))
    if tile_footprint > 24 * 1024 * 1024:
        # Only raise the scoped-VMEM limit when the tile actually needs it,
        # and never beyond the physical capacity of this generation.
        cp_kwargs["vmem_limit_bytes"] = int(min(vmem_cap, tile_footprint + (8 << 20)))

    out2 = pl.pallas_call(
        _model_h_kernel,
        out_shape=jax.ShapeDtypeStruct((rows, cols), out_dtype),
        grid=grid,
        in_specs=[spec, spec, spec],
        out_specs=spec,
        compiler_params=pltpu.CompilerParams(**cp_kwargs),
    )(x2, y2, m2)
    return out2.reshape(orig_shape)


def _reference(x, y, mask):
    return (x - y) * mask


if __name__ == "__main__":
    key = jax.random.PRNGKey(0)
    kx, ky, km = jax.random.split(key, 3)

    # shapeData from the spec is (3, dT, 1) with dT = 2500; batch = 2.
    B, C, dT, W = 2, 3, 2500, 1
    x = jax.random.normal(kx, (B, C, dT, W), dtype=jnp.float32)
    y = jax.random.normal(ky, (B, C, dT, W), dtype=jnp.float32)
    mask = jax.random.bernoulli(km, p=0.5, shape=(B, C, dT, W)).astype(jnp.float32)

    out = jax.block_until_ready(model_h_forward(x, y, mask))
    ref = jax.block_until_ready(_reference(x, y, mask))

    assert out.shape == ref.shape and out.dtype == ref.dtype, (out.shape, ref.shape)
    assert jnp.allclose(out, ref, rtol=1e-6, atol=1e-6), "mismatch vs reference"
    print("KERNEL_OK")
</pallas_src>

<mosaic_0001>
module attributes {stable_mosaic.version = 11 : i64} {
  func.func @_model_h_kernel(%arg0: i32, %arg1: i32, %arg2: memref<8x1875xf32, #tpu.memory_space<vmem>>, %arg3: memref<8x1875xf32, #tpu.memory_space<vmem>>, %arg4: memref<8x1875xf32, #tpu.memory_space<vmem>>, %arg5: memref<8x1875xf32, #tpu.memory_space<vmem>>) attributes {dimension_semantics = [#tpu.dimension_semantics<parallel>, #tpu.dimension_semantics<parallel>], iteration_bounds = array<i64: 1, 1>, scalar_prefetch = 0 : i64, scratch_operands = 0 : i64, tpu.core_type = #tpu.core_type<tc>, window_params = [{transform_indices = @transform_0, window_bounds = array<i64: 8, 1875>}, {transform_indices = @transform_1, window_bounds = array<i64: 8, 1875>}, {transform_indices = @transform_2, window_bounds = array<i64: 8, 1875>}, {transform_indices = @transform_3, window_bounds = array<i64: 8, 1875>}]} {
    %c0 = arith.constant 0 : index
    %c0_0 = arith.constant 0 : index
    %0 = vector.load %arg2[%c0, %c0_0] : memref<8x1875xf32, #tpu.memory_space<vmem>>, vector<8x1875xf32>
    %c0_1 = arith.constant 0 : index
    %c0_2 = arith.constant 0 : index
    %1 = vector.load %arg3[%c0_1, %c0_2] : memref<8x1875xf32, #tpu.memory_space<vmem>>, vector<8x1875xf32>
    %2 = arith.subf %0, %1 : vector<8x1875xf32>
    %c0_3 = arith.constant 0 : index
    %c0_4 = arith.constant 0 : index
    %3 = vector.load %arg4[%c0_3, %c0_4] : memref<8x1875xf32, #tpu.memory_space<vmem>>, vector<8x1875xf32>
    %4 = arith.mulf %2, %3 : vector<8x1875xf32>
    %c0_5 = arith.constant 0 : index
    %c0_6 = arith.constant 0 : index
    %5 = vector.load %arg5[%c0_5, %c0_6] : memref<8x1875xf32, #tpu.memory_space<vmem>>, vector<8x1875xf32>
    tpu.vector_store %arg5[%c0_5, %c0_6], %4 {strides = array<i32>} : memref<8x1875xf32, #tpu.memory_space<vmem>>, vector<8x1875xf32>,
    return
  }
  func.func @transform_0(%arg0: i32, %arg1: i32) -> (i32, i32) {
    %c0_i32 = arith.constant 0 : i32
    return %arg0, %arg1 : i32, i32
  }
  func.func @transform_1(%arg0: i32, %arg1: i32) -> (i32, i32) {
    %c0_i32 = arith.constant 0 : i32
    return %arg0, %arg1 : i32, i32
  }
  func.func @transform_2(%arg0: i32, %arg1: i32) -> (i32, i32) {
    %c0_i32 = arith.constant 0 : i32
    return %arg0, %arg1 : i32, i32
  }
  func.func @transform_3(%arg0: i32, %arg1: i32) -> (i32, i32) {
    %c0_i32 = arith.constant 0 : i32
    return %arg0, %arg1 : i32, i32
  }
}

</mosaic_0001>

<llo_original>
// kernel: tpu_custom_call.1
$region0: #{tpu_custom_call.1}
  #allocation0 [shape = 'u32[]', space=smem, size = 0x4, offset = 0x4, fixed_abs, tag = 'smem constant byte address 0x4 - core index']
  #allocation1 [shape = 'u32[72,128]{1,0:T(1,128)}', space=vmem, size = 0x9000, scoped, tag = 'internal scratch']
  %s0 = inlined_call_operand.hbm [shape: f32[8,1875], index: 0, kind: input, shape index: {}]
  %s1 = inlined_call_operand.hbm [shape: f32[8,1875], index: 1, kind: input, shape index: {}]
  %s2 = inlined_call_operand.hbm [shape: f32[8,1875], index: 2, kind: input, shape index: {}]
  %s3 = inlined_call_operand.hbm [shape: f32[8,1875], index: 3, kind: output, shape index: {}]
  %s4 = sld [smem:[#allocation0]]
  $region34: #{tpu_custom_call.1} parent=0
    _
  %s6 = ssub.s32 1, %s4
  %s7 = scalar_select 0, %s6, %s4
  $region1: #{tpu_custom_call.1} parent=0
    #allocation2 [shape = 'u8[61440]{0}', space=vmem, size = 0xf000, scoped, tag = 'input window, operand 0, single buffered']
    #allocation3 [shape = 's32[1]{0}', space=sflag, size = 0x4, scoped, tag = 'scoped memory for tpu_custom_call.1']
    #allocation4 [shape = 's32[1]{0}', space=sflag, size = 0x4, scoped, tag = 'scoped memory for tpu_custom_call.1']
    #allocation5 [shape = 'u8[61440]{0}', space=vmem, size = 0xf000, scoped, tag = 'input window, operand 1, single buffered']
    #allocation6 [shape = 's32[1]{0}', space=sflag, size = 0x4, scoped, tag = 'scoped memory for tpu_custom_call.1']
    #allocation7 [shape = 'u8[61440]{0}', space=vmem, size = 0xf000, scoped, tag = 'input window, operand 2, single buffered']
    #allocation8 [shape = 'u8[61440]{0}', space=vmem, size = 0xf000, scoped, tag = 'output window, operand 0, single buffered']
    %8 = vsyncpa [#allocation3], 0
    %9 = vsyncpa [#allocation6], 0
    %10 = vsyncpa [#allocation4], 0
    // Predicated region
    $region2: #{tpu_custom_call.1} parent=1 // pred_check
      _
    $region3: #{tpu_custom_call.1} parent=1 // pred_check_branch
      %12 = sbr.rel (0) target = $region5
    $region4: #{tpu_custom_call.1} parent=1 // pred_region
      %14 = vsyncadd [#allocation3], 0
      %s16 = sshll.u32 %s0, 4
      %s17 = int_to_ptr.hbm [resolvable:$true] %s16
      %s18 = sshll.u32 [#allocation2], 4
      %s19 = int_to_ptr.vmem [resolvable:$true] %s18
      %21 = dma.hbm_to_vmem [thread:$0]  %s17, 1920, %s19, [#allocation3]
    $region5: #{tpu_custom_call.1} parent=1 // pred_fallthru
      _
    // Predicated region
    $region6: #{tpu_custom_call.1} parent=1 // pred_check
      _
    $region7: #{tpu_custom_call.1} parent=1 // pred_check_branch
      %23 = sbr.rel (0) target = $region9
    $region8: #{tpu_custom_call.1} parent=1 // pred_region
      %25 = vsyncadd [#allocation6], 0
      %s27 = sshll.u32 %s1, 4
      %s28 = int_to_ptr.hbm [resolvable:$true] %s27
      %s29 = sshll.u32 [#allocation5], 4
      %s30 = int_to_ptr.vmem [resolvable:$true] %s29
      %32 = dma.hbm_to_vmem [thread:$0]  %s28, 1920, %s30, [#allocation6]
    $region9: #{tpu_custom_call.1} parent=1 // pred_fallthru
      _
    // Predicated region
    $region10: #{tpu_custom_call.1} parent=1 // pred_check
      _
    $region11: #{tpu_custom_call.1} parent=1 // pred_check_branch
      %34 = sbr.rel (0) target = $region13
    $region12: #{tpu_custom_call.1} parent=1 // pred_region
      %36 = vsyncadd [#allocation6], 0
      %s38 = sshll.u32 %s2, 4
      %s39 = int_to_ptr.hbm [resolvable:$true] %s38
      %s40 = sshll.u32 [#allocation7], 4
      %s41 = int_to_ptr.vmem [resolvable:$true] %s40
      %43 = dma.hbm_to_vmem [thread:$0]  %s39, 1920, %s41, [#allocation6]
    $region13: #{tpu_custom_call.1} parent=1 // pred_fallthru
      _
    // Predicated region
    $region14: #{tpu_custom_call.1} parent=1 // pred_check
      _
    $region15: #{tpu_custom_call.1} parent=1 // pred_check_branch
      %45 = sbr.rel (0) target = $region17
    $region16: #{tpu_custom_call.1} parent=1 // pred_region
      %47 = dma.done [#allocation3], 1920
    $region17: #{tpu_custom_call.1} parent=1 // pred_fallthru
      _
    // Predicated region
    $region18: #{tpu_custom_call.1} parent=1 // pred_check
      _
    $region19: #{tpu_custom_call.1} parent=1 // pred_check_branch
      %49 = sbr.rel (0) target = $region21
    $region20: #{tpu_custom_call.1} parent=1 // pred_region
      %51 = dma.done [#allocation6], 1920
    $region21: #{tpu_custom_call.1} parent=1 // pred_fallthru
      _
    // Predicated region
    $region22: #{tpu_custom_call.1} parent=1 // pred_check
      _
    $region23: #{tpu_custom_call.1} parent=1 // pred_check_branch
      %53 = sbr.rel (0) target = $region25
    $region24: #{tpu_custom_call.1} parent=1 // pred_region
      %55 = dma.done [#allocation6], 1920
    $region25: #{tpu_custom_call.1} parent=1 // pred_fallthru
      _
    %v56 = vld [vmem:[#allocation2] sm:$0xff]
    %v57 = vld [vmem:[#allocation2 + $0x8] sm:$0xff]
    %v58 = vld [vmem:[#allocation2 + $0x10] sm:$0xff]
    %v59 = vld [vmem:[#allocation2 + $0x18] sm:$0xff]
    %v60 = vld [vmem:[#allocation2 + $0x20] sm:$0xff]
    %v61 = vld [vmem:[#allocation2 + $0x28] sm:$0xff]
    %v62 = vld [vmem:[#allocation2 + $0x30] sm:$0xff]
    %v63 = vld [vmem:[#allocation2 + $0x38] sm:$0xff]
    %v64 = vld [vmem:[#allocation2 + $0x40] sm:$0xff]
    %v65 = vld [vmem:[#allocation2 + $0x48] sm:$0xff]
    %v66 = vld [vmem:[#allocation2 + $0x50] sm:$0xff]
    %v67 = vld [vmem:[#allocation2 + $0x58] sm:$0xff]
    %v68 = vld [vmem:[#allocation2 + $0x60] sm:$0xff]
    %v69 = vld [vmem:[#allocation2 + $0x68] sm:$0xff]
    %v70 = vld [vmem:[#allocation2 + $0x70] sm:$0xff]
    %v71 = vld [vmem:[#allocation5] sm:$0xff]
    %v72 = vld [vmem:[#allocation5 + $0x8] sm:$0xff]
    %v73 = vld [vmem:[#allocation5 + $0x10] sm:$0xff]
    %v74 = vld [vmem:[#allocation5 + $0x18] sm:$0xff]
    %v75 = vld [vmem:[#allocation5 + $0x20] sm:$0xff]
    %v76 = vld [vmem:[#allocation5 + $0x28] sm:$0xff]
    %v77 = vld [vmem:[#allocation5 + $0x30] sm:$0xff]
    %v78 = vld [vmem:[#allocation5 + $0x38] sm:$0xff]
    %v79 = vld [vmem:[#allocation5 + $0x40] sm:$0xff]
    %v80 = vld [vmem:[#allocation5 + $0x48] sm:$0xff]
    %v81 = vld [vmem:[#allocation5 + $0x50] sm:$0xff]
    %v82 = vld [vmem:[#allocation5 + $0x58] sm:$0xff]
    %v83 = vld [vmem:[#allocation5 + $0x60] sm:$0xff]
    %v84 = vld [vmem:[#allocation5 + $0x68] sm:$0xff]
    %v85 = vld [vmem:[#allocation5 + $0x70] sm:$0xff]
    %v86 = vsub.f32 %v56, %v71
    %v87 = vsub.f32 %v57, %v72
    %v88 = vsub.f32 %v58, %v73
    %v89 = vsub.f32 %v59, %v74
    %v90 = vsub.f32 %v60, %v75
    %v91 = vsub.f32 %v61, %v76
    %v92 = vsub.f32 %v62, %v77
    %v93 = vsub.f32 %v63, %v78
    %v94 = vsub.f32 %v64, %v79
    %v95 = vsub.f32 %v65, %v80
    %v96 = vsub.f32 %v66, %v81
    %v97 = vsub.f32 %v67, %v82
    %v98 = vsub.f32 %v68, %v83
    %v99 = vsub.f32 %v69, %v84
    %v100 = vsub.f32 %v70, %v85
    %v101 = vld [vmem:[#allocation7] sm:$0xff]
    %v102 = vld [vmem:[#allocation7 + $0x8] sm:$0xff]
    %v103 = vld [vmem:[#allocation7 + $0x10] sm:$0xff]
    %v104 = vld [vmem:[#allocation7 + $0x18] sm:$0xff]
    %v105 = vld [vmem:[#allocation7 + $0x20] sm:$0xff]
    %v106 = vld [vmem:[#allocation7 + $0x28] sm:$0xff]
    %v107 = vld [vmem:[#allocation7 + $0x30] sm:$0xff]
    %v108 = vld [vmem:[#allocation7 + $0x38] sm:$0xff]
    %v109 = vld [vmem:[#allocation7 + $0x40] sm:$0xff]
    %v110 = vld [vmem:[#allocation7 + $0x48] sm:$0xff]
    %v111 = vld [vmem:[#allocation7 + $0x50] sm:$0xff]
    %v112 = vld [vmem:[#allocation7 + $0x58] sm:$0xff]
    %v113 = vld [vmem:[#allocation7 + $0x60] sm:$0xff]
    %v114 = vld [vmem:[#allocation7 + $0x68] sm:$0xff]
    %v115 = vld [vmem:[#allocation7 + $0x70] sm:$0xff]
    %v116 = vmul.f32 %v86, %v101
    %v117 = vmul.f32 %v87, %v102
    %v118 = vmul.f32 %v88, %v103
    %v119 = vmul.f32 %v89, %v104
    %v120 = vmul.f32 %v90, %v105
    %v121 = vmul.f32 %v91, %v106
    %v122 = vmul.f32 %v92, %v107
    %v123 = vmul.f32 %v93, %v108
    %v124 = vmul.f32 %v94, %v109
    %v125 = vmul.f32 %v95, %v110
    %v126 = vmul.f32 %v96, %v111
    %v127 = vmul.f32 %v97, %v112
    %v128 = vmul.f32 %v98, %v113
    %v129 = vmul.f32 %v99, %v114
    %v130 = vmul.f32 %v100, %v115
    %131 = vst [vmem:[#allocation8] sm:$0xff] %v116
    %132 = vst [vmem:[#allocation8 + $0x8] sm:$0xff] %v117
    %133 = vst [vmem:[#allocation8 + $0x10] sm:$0xff] %v118
    %134 = vst [vmem:[#allocation8 + $0x18] sm:$0xff] %v119
    %135 = vst [vmem:[#allocation8 + $0x20] sm:$0xff] %v120
    %136 = vst [vmem:[#allocation8 + $0x28] sm:$0xff] %v121
    %137 = vst [vmem:[#allocation8 + $0x30] sm:$0xff] %v122
    %138 = vst [vmem:[#allocation8 + $0x38] sm:$0xff] %v123
    %139 = vst [vmem:[#allocation8 + $0x40] sm:$0xff] %v124
    %140 = vst [vmem:[#allocation8 + $0x48] sm:$0xff] %v125
    %141 = vst [vmem:[#allocation8 + $0x50] sm:$0xff] %v126
    %142 = vst [vmem:[#allocation8 + $0x58] sm:$0xff] %v127
    %143 = vst [vmem:[#allocation8 + $0x60] sm:$0xff] %v128
    %144 = vst [vmem:[#allocation8 + $0x68] sm:$0xff] %v129
    %vm145 = vcmask 678912
    %146 = vst.msk [vmem:[#allocation8 + $0x70] sm:$0xff] %vm145, %v130
    // Predicated region
    $region26: #{tpu_custom_call.1} parent=1 // pred_check
      _
    $region27: #{tpu_custom_call.1} parent=1 // pred_check_branch
      %148 = sbr.rel (0) target = $region29
    $region28: #{tpu_custom_call.1} parent=1 // pred_region
      %150 = vsyncadd [#allocation4], 0
      %s152 = sshll.u32 [#allocation8], 4
      %s153 = int_to_ptr.vmem [resolvable:$true] %s152
      %s154 = sshll.u32 %s3, 4
      %s155 = int_to_ptr.hbm [resolvable:$true] %s154
      %157 = dma.vmem_to_hbm [thread:$0]  %s153, 1920, %s155, [#allocation4]
    $region29: #{tpu_custom_call.1} parent=1 // pred_fallthru
      _
    // Predicated region
    $region30: #{tpu_custom_call.1} parent=1 // pred_check
      _
    $region31: #{tpu_custom_call.1} parent=1 // pred_check_branch
      %159 = sbr.rel (0) target = $region33
    $region32: #{tpu_custom_call.1} parent=1 // pred_region
      %161 = dma.done [#allocation4], 1920
    $region33: #{tpu_custom_call.1} parent=1 // pred_fallthru
      _
    %162 = vsyncpa [#allocation3], 1
    %163 = vsyncpa [#allocation6], 1
    %164 = vsyncpa [#allocation4], 1

</llo_original>
